<compile_context>
chip_gen: v6e
topology: v6e:2x2x1
jax: 0.10.0
libtpu: 0.0.40
codegen_flags: <defaults>
</compile_context>

<pallas_src>
import functools

import jax
import jax.numpy as jnp
from jax.experimental import pallas as pl
from jax.experimental.pallas import tpu as pltpu

LANE = 128       # vreg lane width
TILE_N = 16      # point-axis tile; multiple of 16 (bf16 sublane packing)


def _round_up(x, m):
    return (x + m - 1) // m * m


# ----------------------------------------------------------------------------
# Pallas kernel: per-(sample, point-tile) conv stack -> running max -> FC head
# ----------------------------------------------------------------------------
def make_encoder_kernel(n_conv, n_fc):
    n_layers = n_conv + n_fc

    def kernel(*refs):
        x_ref = refs[0]                         # (1, TILE_N, 128) bf16
        w_refs = refs[1:1 + n_layers]           # padded bf16 weight blocks
        bias_ref = refs[1 + n_layers]           # (n_layers, MAXW) f32
        out_ref = refs[1 + n_layers + 1]        # (1, 1, OUT_PAD) f32
        gmax_ref = refs[-1]                     # (1, CONV_OUT_PAD) f32 scratch

        nt = pl.program_id(1)

        @pl.when(nt == 0)
        def _init():
            gmax_ref[...] = jnp.full(gmax_ref.shape, -jnp.inf, gmax_ref.dtype)

        # point-wise conv stack (Conv1d k=1 + folded eval-BN + ReLU), this tile
        h = x_ref[0]                            # (TILE_N, 128) bf16
        for li in range(n_conv):
            z = jnp.dot(h, w_refs[li][...],
                        preferred_element_type=jnp.float32)
            b = bias_ref[pl.ds(li, 1), :][:, :z.shape[-1]]
            z = jnp.maximum(z + b, 0.0)         # f32 elementwise (v5e-safe)
            h = z.astype(jnp.bfloat16) if li < n_conv - 1 else z

        # symmetric function: running max over the point axis
        gmax_ref[...] = jnp.maximum(gmax_ref[...],
                                    jnp.max(h, axis=0, keepdims=True))

        # FC head (last layer linear -> [mu | logvar]) only on the last tile
        @pl.when(nt == pl.num_programs(1) - 1)
        def _finish():
            g = gmax_ref[...]                   # (1, CONV_OUT_PAD) f32
            for li in range(n_fc):
                z = jnp.dot(g.astype(jnp.bfloat16), w_refs[n_conv + li][...],
                            preferred_element_type=jnp.float32)
                b = bias_ref[pl.ds(n_conv + li, 1), :][:, :z.shape[-1]]
                g = z + b
                if li < n_fc - 1:
                    g = jnp.maximum(g, 0.0)
            out_ref[0] = g.astype(out_ref.dtype)    # lane-dense store

    return kernel


# ----------------------------------------------------------------------------
# One-time parameter preparation (hoisted out of the per-call path)
# ----------------------------------------------------------------------------
def _pad_w(w):
    din, dout = w.shape
    wp = jnp.zeros((_round_up(din, LANE), _round_up(dout, LANE)), jnp.float32)
    return wp.at[:din, :dout].set(w)


def prepare_params(params):
    """Pad weights to lane-dense bf16 blocks; stack biases into one f32 array."""
    ws = [_pad_w(w) for w in list(params["conv_w"]) + list(params["fc_w"])]
    ws = tuple(w.astype(jnp.bfloat16) for w in ws)
    bs = list(params["conv_b"]) + list(params["fc_b"])
    maxw = max(w.shape[1] for w in ws)
    bias = jnp.zeros((len(bs), maxw), jnp.float32)
    for i, b in enumerate(bs):
        b = jnp.asarray(b).reshape(-1)
        bias = bias.at[i, :b.shape[0]].set(b)
    return ws, bias


# ----------------------------------------------------------------------------
# Jitted wrapper: layout plumbing + pallas_call
# ----------------------------------------------------------------------------
@functools.partial(jax.jit,
                   static_argnames=("n_conv", "n_fc", "out_dim", "tile_n"))
def encoder_forward(x_ncw, weights, bias_stack, *, n_conv, n_fc, out_dim,
                    tile_n=TILE_N):
    """x_ncw: (B, C_in, N) float32 — PyTorch Conv1d layout."""
    B, C_in, N = x_ncw.shape
    N_pad = _round_up(N, tile_n)

    # (B, C_in, N) -> (B, N_pad, 128): channel-last (lane), zero-padded lanes,
    # padded points are duplicates of point 0 (exact under max, no -inf mask).
    x_t = jnp.transpose(x_ncw, (0, 2, 1)).astype(jnp.float32)
    x_c = jnp.zeros((B, N, LANE), jnp.float32).at[:, :, :C_in].set(x_t)
    if N_pad > N:
        dup = jnp.broadcast_to(x_c[:, :1, :], (B, N_pad - N, LANE))
        x_c = jnp.concatenate([x_c, dup], axis=1)
    x_p = x_c.astype(jnp.bfloat16)

    conv_out_pad = weights[n_conv - 1].shape[1]
    out_pad = weights[-1].shape[1]
    n_tiles = N_pad // tile_n

    kernel = make_encoder_kernel(n_conv, n_fc)

    # Weights/biases: full-array blocks, index_map constant across the grid.
    # TODO(synk): at production sizes add pipeline_mode=pl.Buffered(1) here so
    #             reduction-invariant weights are single-buffered (v7x VMEM).
    w_specs = [pl.BlockSpec(w.shape, lambda b, k: (0, 0)) for w in weights]

    out = pl.pallas_call(
        kernel,
        out_shape=jax.ShapeDtypeStruct((B, 1, out_pad), jnp.float32),
        grid_spec=pltpu.PrefetchScalarGridSpec(
            num_scalar_prefetch=0,
            grid=(B, n_tiles),
            in_specs=[pl.BlockSpec((1, tile_n, LANE), lambda b, k: (b, k, 0))]
                     + w_specs
                     + [pl.BlockSpec(bias_stack.shape, lambda b, k: (0, 0))],
            out_specs=pl.BlockSpec((1, 1, out_pad), lambda b, k: (b, 0, 0)),
            scratch_shapes=[pltpu.VMEM((1, conv_out_pad), jnp.float32)],
        ),
        compiler_params=pltpu.CompilerParams(
            dimension_semantics=("parallel", "arbitrary")),
    )(x_p, *weights, bias_stack)

    return out[:, 0, :out_dim]


# ----------------------------------------------------------------------------
# Deterministic parameter construction (synthetic weights, no checkpoint)
# ----------------------------------------------------------------------------
def make_params(key, c_in, conv_layers_size, conv_out_dim,
                fc_layers_size, latent_dim):
    conv_dims = [c_in] + list(conv_layers_size) + [conv_out_dim]
    fc_dims = [conv_out_dim] + list(fc_layers_size) + [latent_dim * 2]
    eps = 1e-5

    conv_w, conv_b = [], []
    for i in range(len(conv_dims) - 1):
        key, k1, k2, k3, k4, k5, k6 = jax.random.split(key, 7)
        cin, cout = conv_dims[i], conv_dims[i + 1]
        W = jax.random.normal(k1, (cout, cin), jnp.float32) * 0.2   # Conv1d k=1
        b = jax.random.normal(k2, (cout,), jnp.float32) * 0.1
        gamma = 1.0 + 0.1 * jax.random.normal(k3, (cout,), jnp.float32)
        beta = 0.1 * jax.random.normal(k4, (cout,), jnp.float32)
        rmean = 0.1 * jax.random.normal(k5, (cout,), jnp.float32)
        rvar = 1.0 + 0.1 * jax.random.uniform(k6, (cout,), jnp.float32)
        # fold eval-mode BatchNorm1d into the conv: y = s*(Wx + b - mean) + beta
        s = gamma / jnp.sqrt(rvar + eps)
        W_eff = (W * s[:, None]).T                                  # (cin, cout)
        b_eff = (s * (b - rmean) + beta)[None, :]                   # (1, cout)
        conv_w.append(W_eff)
        conv_b.append(b_eff)

    fc_w, fc_b = [], []
    for i in range(len(fc_dims) - 1):
        key, k1, k2 = jax.random.split(key, 3)
        din, dout = fc_dims[i], fc_dims[i + 1]
        W = jax.random.normal(k1, (din, dout), jnp.float32) * 0.2
        b = (jax.random.normal(k2, (dout,), jnp.float32) * 0.1)[None, :]
        fc_w.append(W)
        fc_b.append(b)

    return {"conv_w": conv_w, "conv_b": conv_b, "fc_w": fc_w, "fc_b": fc_b}


# ----------------------------------------------------------------------------
# Pure-JAX reference mirroring kernel numerics (bf16 matmul operands, f32 acc)
# ----------------------------------------------------------------------------
def encoder_reference(x_ncw, params):
    h = jnp.transpose(x_ncw, (0, 2, 1)).astype(jnp.float32)   # (B, N, C_in)
    for W, b in zip(params["conv_w"], params["conv_b"]):
        z = jnp.dot(h.astype(jnp.bfloat16), W.astype(jnp.bfloat16),
                    preferred_element_type=jnp.float32)
        h = jnp.maximum(z + b, 0.0)
    g = jnp.max(h, axis=1)                                     # (B, conv_out)
    n_fc = len(params["fc_w"])
    for i, (W, b) in enumerate(zip(params["fc_w"], params["fc_b"])):
        z = jnp.dot(g.astype(jnp.bfloat16), W.astype(jnp.bfloat16),
                    preferred_element_type=jnp.float32)
        g = z + b
        if i < n_fc - 1:
            g = jnp.maximum(g, 0.0)
    return g


if __name__ == "__main__":
    config = {
        "latent_dim": 4,
        "conv_out_dim": 32,
        "conv_layers_size": [8, 16],
        "fc_layers_size": [32, 16],
        "transformers_position": [],   # TODO(synk): T-Net bmm transforms omitted
    }

    B, C_in, N = 2, 3, 20              # (batch, xyz channels, num points)

    key = jax.random.PRNGKey(0)
    key, kx = jax.random.split(key)
    x = jax.random.normal(kx, (B, C_in, N), jnp.float32)

    params = make_params(key, C_in,
                         config["conv_layers_size"],
                         config["conv_out_dim"],
                         config["fc_layers_size"],
                         config["latent_dim"])

    weights, bias_stack = prepare_params(params)       # one-time padding/bf16
    n_conv = len(params["conv_w"])
    n_fc = len(params["fc_w"])
    out_dim = config["latent_dim"] * 2

    out = encoder_forward(x, weights, bias_stack,
                          n_conv=n_conv, n_fc=n_fc, out_dim=out_dim)
    out = jax.block_until_ready(out)

    ref = encoder_reference(x, params)
    assert out.shape == (B, out_dim)
    assert jnp.allclose(out, ref, atol=2e-3, rtol=2e-3), "mismatch vs reference"

    print("KERNEL_OK")
</pallas_src>

<mosaic_0001>
module attributes {stable_mosaic.version = 11 : i64} {
  func.func @kernel(%arg0: i32, %arg1: i32, %arg2: memref<1x16x128xbf16, #tpu.memory_space<vmem>>, %arg3: memref<128x128xbf16, #tpu.memory_space<vmem>>, %arg4: memref<128x128xbf16, #tpu.memory_space<vmem>>, %arg5: memref<128x128xbf16, #tpu.memory_space<vmem>>, %arg6: memref<128x128xbf16, #tpu.memory_space<vmem>>, %arg7: memref<128x128xbf16, #tpu.memory_space<vmem>>, %arg8: memref<128x128xbf16, #tpu.memory_space<vmem>>, %arg9: memref<6x128xf32, #tpu.memory_space<vmem>>, %arg10: memref<1x1x128xf32, #tpu.memory_space<vmem>>, %arg11: memref<1x128xf32, #tpu.memory_space<vmem>>) attributes {dimension_semantics = [#tpu.dimension_semantics<parallel>, #tpu.dimension_semantics<arbitrary>], iteration_bounds = array<i64: 2, 2>, scalar_prefetch = 0 : i64, scratch_operands = 1 : i64, tpu.core_type = #tpu.core_type<tc>, window_params = [{transform_indices = @transform_0, window_bounds = array<i64: 1, 16, 128>}, {pipeline_mode = #tpu.pipeline_mode<synchronous>, transform_indices = @transform_1, window_bounds = array<i64: 128, 128>}, {pipeline_mode = #tpu.pipeline_mode<synchronous>, transform_indices = @transform_2, window_bounds = array<i64: 128, 128>}, {pipeline_mode = #tpu.pipeline_mode<synchronous>, transform_indices = @transform_3, window_bounds = array<i64: 128, 128>}, {pipeline_mode = #tpu.pipeline_mode<synchronous>, transform_indices = @transform_4, window_bounds = array<i64: 128, 128>}, {pipeline_mode = #tpu.pipeline_mode<synchronous>, transform_indices = @transform_5, window_bounds = array<i64: 128, 128>}, {pipeline_mode = #tpu.pipeline_mode<synchronous>, transform_indices = @transform_6, window_bounds = array<i64: 128, 128>}, {pipeline_mode = #tpu.pipeline_mode<synchronous>, transform_indices = @transform_7, window_bounds = array<i64: 6, 128>}, {transform_indices = @transform_8, window_bounds = array<i64: 1, 1, 128>}]} {
    %c0_i32 = arith.constant 0 : i32
    %0 = arith.cmpi eq, %arg1, %c0_i32 : i32
    %1 = arith.extui %0 : i1 to i32
    %c0_i32_0 = arith.constant 0 : i32
    %2 = arith.cmpi ne, %1, %c0_i32_0 : i32
    scf.if %2 {
      %cst_24 = arith.constant 0xFF800000 : f32
      %36 = vector.broadcast %cst_24 : f32 to vector<1x128xf32>
      %c0_25 = arith.constant 0 : index
      %c0_26 = arith.constant 0 : index
      %37 = vector.load %arg11[%c0_25, %c0_26] : memref<1x128xf32, #tpu.memory_space<vmem>>, vector<1x128xf32>
      tpu.vector_store %arg11[%c0_25, %c0_26], %36 {strides = array<i32>} : memref<1x128xf32, #tpu.memory_space<vmem>>, vector<1x128xf32>,
    } else {
    }
    %c0 = arith.constant 0 : index
    %c0_1 = arith.constant 0 : index
    %c0_2 = arith.constant 0 : index
    %3 = vector.load %arg2[%c0, %c0_1, %c0_2] : memref<1x16x128xbf16, #tpu.memory_space<vmem>>, vector<1x16x128xbf16>
    %4 = vector.shape_cast %3 : vector<1x16x128xbf16> to vector<16x128xbf16>
    %c0_3 = arith.constant 0 : index
    %c0_4 = arith.constant 0 : index
    %5 = vector.load %arg3[%c0_3, %c0_4] : memref<128x128xbf16, #tpu.memory_space<vmem>>, vector<128x128xbf16>
    %cst = arith.constant dense<0.000000e+00> : vector<16x128xf32>
    %6 = tpu.matmul %4, %5, %cst {dimension_numbers = #tpu.dot_dimension_numbers<[1], [0], [0], [1], [0, 0, 1, 1], [], []>} : vector<16x128xbf16>, vector<128x128xbf16>, vector<16x128xf32> -> vector<16x128xf32>
    %c0_5 = arith.constant 0 : index
    %c0_6 = arith.constant 0 : index
    %7 = vector.load %arg9[%c0_5, %c0_6] : memref<6x128xf32, #tpu.memory_space<vmem>>, vector<1x128xf32>
    %8 = vector.broadcast %7 : vector<1x128xf32> to vector<16x128xf32>
    %9 = arith.addf %6, %8 : vector<16x128xf32>
    %cst_7 = arith.constant 0.000000e+00 : f32
    %10 = vector.broadcast %cst_7 : f32 to vector<16x128xf32>
    %11 = arith.maximumf %9, %10 : vector<16x128xf32>
    %12 = arith.truncf %11 : vector<16x128xf32> to vector<16x128xbf16>
    %c0_8 = arith.constant 0 : index
    %c0_9 = arith.constant 0 : index
    %13 = vector.load %arg4[%c0_8, %c0_9] : memref<128x128xbf16, #tpu.memory_space<vmem>>, vector<128x128xbf16>
    %cst_10 = arith.constant dense<0.000000e+00> : vector<16x128xf32>
    %14 = tpu.matmul %12, %13, %cst_10 {dimension_numbers = #tpu.dot_dimension_numbers<[1], [0], [0], [1], [0, 0, 1, 1], [], []>} : vector<16x128xbf16>, vector<128x128xbf16>, vector<16x128xf32> -> vector<16x128xf32>
    %c1 = arith.constant 1 : index
    %c0_11 = arith.constant 0 : index
    %15 = vector.load %arg9[%c1, %c0_11] : memref<6x128xf32, #tpu.memory_space<vmem>>, vector<1x128xf32>
    %16 = vector.broadcast %15 : vector<1x128xf32> to vector<16x128xf32>
    %17 = arith.addf %14, %16 : vector<16x128xf32>
    %cst_12 = arith.constant 0.000000e+00 : f32
    %18 = vector.broadcast %cst_12 : f32 to vector<16x128xf32>
    %19 = arith.maximumf %17, %18 : vector<16x128xf32>
    %20 = arith.truncf %19 : vector<16x128xf32> to vector<16x128xbf16>
    %c0_13 = arith.constant 0 : index
    %c0_14 = arith.constant 0 : index
    %21 = vector.load %arg5[%c0_13, %c0_14] : memref<128x128xbf16, #tpu.memory_space<vmem>>, vector<128x128xbf16>
    %cst_15 = arith.constant dense<0.000000e+00> : vector<16x128xf32>
    %22 = tpu.matmul %20, %21, %cst_15 {dimension_numbers = #tpu.dot_dimension_numbers<[1], [0], [0], [1], [0, 0, 1, 1], [], []>} : vector<16x128xbf16>, vector<128x128xbf16>, vector<16x128xf32> -> vector<16x128xf32>
    %c2 = arith.constant 2 : index
    %c0_16 = arith.constant 0 : index
    %23 = vector.load %arg9[%c2, %c0_16] : memref<6x128xf32, #tpu.memory_space<vmem>>, vector<1x128xf32>
    %24 = vector.broadcast %23 : vector<1x128xf32> to vector<16x128xf32>
    %25 = arith.addf %22, %24 : vector<16x128xf32>
    %cst_17 = arith.constant 0.000000e+00 : f32
    %26 = vector.broadcast %cst_17 : f32 to vector<16x128xf32>
    %27 = arith.maximumf %25, %26 : vector<16x128xf32>
    %c0_18 = arith.constant 0 : index
    %c0_19 = arith.constant 0 : index
    %28 = vector.load %arg11[%c0_18, %c0_19] : memref<1x128xf32, #tpu.memory_space<vmem>>, vector<1x128xf32>
    %cst_20 = arith.constant dense<0xFF800000> : vector<128xf32>
    %29 = vector.multi_reduction <maximumf>, %27, %cst_20 [0] : vector<16x128xf32> to vector<128xf32>
    %30 = vector.shape_cast %29 : vector<128xf32> to vector<1x128xf32>
    %31 = arith.maximumf %28, %30 : vector<1x128xf32>
    %c0_21 = arith.constant 0 : index
    %c0_22 = arith.constant 0 : index
    %32 = vector.load %arg11[%c0_21, %c0_22] : memref<1x128xf32, #tpu.memory_space<vmem>>, vector<1x128xf32>
    tpu.vector_store %arg11[%c0_21, %c0_22], %31 {strides = array<i32>} : memref<1x128xf32, #tpu.memory_space<vmem>>, vector<1x128xf32>,
    %c1_i32 = arith.constant 1 : i32
    %33 = arith.cmpi eq, %arg1, %c1_i32 : i32
    %34 = arith.extui %33 : i1 to i32
    %c0_i32_23 = arith.constant 0 : i32
    %35 = arith.cmpi ne, %34, %c0_i32_23 : i32
    scf.if %35 {
      %c0_24 = arith.constant 0 : index
      %c0_25 = arith.constant 0 : index
      %36 = vector.load %arg11[%c0_24, %c0_25] : memref<1x128xf32, #tpu.memory_space<vmem>>, vector<1x128xf32>
      %37 = arith.truncf %36 : vector<1x128xf32> to vector<1x128xbf16>
      %c0_26 = arith.constant 0 : index
      %c0_27 = arith.constant 0 : index
      %38 = vector.load %arg6[%c0_26, %c0_27] : memref<128x128xbf16, #tpu.memory_space<vmem>>, vector<128x128xbf16>
      %cst_28 = arith.constant dense<0.000000e+00> : vector<1x128xf32>
      %39 = tpu.matmul %37, %38, %cst_28 {dimension_numbers = #tpu.dot_dimension_numbers<[1], [0], [0], [1], [0, 0, 1, 1], [], []>} : vector<1x128xbf16>, vector<128x128xbf16>, vector<1x128xf32> -> vector<1x128xf32>
      %c3 = arith.constant 3 : index
      %c0_29 = arith.constant 0 : index
      %40 = vector.load %arg9[%c3, %c0_29] : memref<6x128xf32, #tpu.memory_space<vmem>>, vector<1x128xf32>
      %41 = arith.addf %39, %40 : vector<1x128xf32>
      %cst_30 = arith.constant 0.000000e+00 : f32
      %42 = vector.broadcast %cst_30 : f32 to vector<1x128xf32>
      %43 = arith.maximumf %41, %42 : vector<1x128xf32>
      %44 = arith.truncf %43 : vector<1x128xf32> to vector<1x128xbf16>
      %c0_31 = arith.constant 0 : index
      %c0_32 = arith.constant 0 : index
      %45 = vector.load %arg7[%c0_31, %c0_32] : memref<128x128xbf16, #tpu.memory_space<vmem>>, vector<128x128xbf16>
      %cst_33 = arith.constant dense<0.000000e+00> : vector<1x128xf32>
      %46 = tpu.matmul %44, %45, %cst_33 {dimension_numbers = #tpu.dot_dimension_numbers<[1], [0], [0], [1], [0, 0, 1, 1], [], []>} : vector<1x128xbf16>, vector<128x128xbf16>, vector<1x128xf32> -> vector<1x128xf32>
      %c4 = arith.constant 4 : index
      %c0_34 = arith.constant 0 : index
      %47 = vector.load %arg9[%c4, %c0_34] : memref<6x128xf32, #tpu.memory_space<vmem>>, vector<1x128xf32>
      %48 = arith.addf %46, %47 : vector<1x128xf32>
      %cst_35 = arith.constant 0.000000e+00 : f32
      %49 = vector.broadcast %cst_35 : f32 to vector<1x128xf32>
      %50 = arith.maximumf %48, %49 : vector<1x128xf32>
      %51 = arith.truncf %50 : vector<1x128xf32> to vector<1x128xbf16>
      %c0_36 = arith.constant 0 : index
      %c0_37 = arith.constant 0 : index
      %52 = vector.load %arg8[%c0_36, %c0_37] : memref<128x128xbf16, #tpu.memory_space<vmem>>, vector<128x128xbf16>
      %cst_38 = arith.constant dense<0.000000e+00> : vector<1x128xf32>
      %53 = tpu.matmul %51, %52, %cst_38 {dimension_numbers = #tpu.dot_dimension_numbers<[1], [0], [0], [1], [0, 0, 1, 1], [], []>} : vector<1x128xbf16>, vector<128x128xbf16>, vector<1x128xf32> -> vector<1x128xf32>
      %c5 = arith.constant 5 : index
      %c0_39 = arith.constant 0 : index
      %54 = vector.load %arg9[%c5, %c0_39] : memref<6x128xf32, #tpu.memory_space<vmem>>, vector<1x128xf32>
      %55 = arith.addf %53, %54 : vector<1x128xf32>
      %c0_40 = arith.constant 0 : index
      %c0_41 = arith.constant 0 : index
      %c0_42 = arith.constant 0 : index
      %56 = vector.load %arg10[%c0_40, %c0_41, %c0_42] : memref<1x1x128xf32, #tpu.memory_space<vmem>>, vector<1x1x128xf32>
      %57 = vector.shape_cast %56 : vector<1x1x128xf32> to vector<1x128xf32>
      %58 = vector.shape_cast %55 : vector<1x128xf32> to vector<1x1x128xf32>
      tpu.vector_store %arg10[%c0_40, %c0_41, %c0_42], %58 {strides = array<i32>} : memref<1x1x128xf32, #tpu.memory_space<vmem>>, vector<1x1x128xf32>,
    } else {
    }
    return
  }
  func.func @transform_0(%arg0: i32, %arg1: i32) -> (i32, i32, i32) {
    %c0_i32 = arith.constant 0 : i32
    %c0_i32_0 = arith.constant 0 : i32
    return %arg0, %arg1, %c0_i32 : i32, i32, i32
  }
  func.func @transform_1(%arg0: i32, %arg1: i32) -> (i32, i32) {
    %c0_i32 = arith.constant 0 : i32
    %c0_i32_0 = arith.constant 0 : i32
    %c0_i32_1 = arith.constant 0 : i32
    return %c0_i32, %c0_i32_0 : i32, i32
  }
  func.func @transform_2(%arg0: i32, %arg1: i32) -> (i32, i32) {
    %c0_i32 = arith.constant 0 : i32
    %c0_i32_0 = arith.constant 0 : i32
    %c0_i32_1 = arith.constant 0 : i32
    return %c0_i32, %c0_i32_0 : i32, i32
  }
  func.func @transform_3(%arg0: i32, %arg1: i32) -> (i32, i32) {
    %c0_i32 = arith.constant 0 : i32
    %c0_i32_0 = arith.constant 0 : i32
    %c0_i32_1 = arith.constant 0 : i32
    return %c0_i32, %c0_i32_0 : i32, i32
  }
  func.func @transform_4(%arg0: i32, %arg1: i32) -> (i32, i32) {
    %c0_i32 = arith.constant 0 : i32
    %c0_i32_0 = arith.constant 0 : i32
    %c0_i32_1 = arith.constant 0 : i32
    return %c0_i32, %c0_i32_0 : i32, i32
  }
  func.func @transform_5(%arg0: i32, %arg1: i32) -> (i32, i32) {
    %c0_i32 = arith.constant 0 : i32
    %c0_i32_0 = arith.constant 0 : i32
    %c0_i32_1 = arith.constant 0 : i32
    return %c0_i32, %c0_i32_0 : i32, i32
  }
  func.func @transform_6(%arg0: i32, %arg1: i32) -> (i32, i32) {
    %c0_i32 = arith.constant 0 : i32
    %c0_i32_0 = arith.constant 0 : i32
    %c0_i32_1 = arith.constant 0 : i32
    return %c0_i32, %c0_i32_0 : i32, i32
  }
  func.func @transform_7(%arg0: i32, %arg1: i32) -> (i32, i32) {
    %c0_i32 = arith.constant 0 : i32
    %c0_i32_0 = arith.constant 0 : i32
    %c0_i32_1 = arith.constant 0 : i32
    return %c0_i32, %c0_i32_0 : i32, i32
  }
  func.func @transform_8(%arg0: i32, %arg1: i32) -> (i32, i32, i32) {
    %c0_i32 = arith.constant 0 : i32
    %c0_i32_0 = arith.constant 0 : i32
    %c0_i32_1 = arith.constant 0 : i32
    return %arg0, %c0_i32, %c0_i32_0 : i32, i32, i32
  }
}

</mosaic_0001>

<llo_original>
// kernel: encoder_forward.1
$region0: #{encoder_forward.1}
  #allocation0 [shape = 'u32[]', space=smem, size = 0x4, offset = 0x4, fixed_abs, tag = 'smem constant byte address 0x4 - core index']
  #allocation1 [shape = 'u32[144,128]{1,0:T(1,128)}', space=vmem, size = 0x12000, scoped, tag = 'internal scratch']
  #allocation2 [shape = 'f32[1,128]{1,0:T(1,128)}', space=vmem, size = 0x200, scoped, tag = 'scratch operand']
  %s0 = inlined_call_operand.vmem [shape: bf16[2,32,128], index: 0, kind: input, shape index: {}]
  %s1 = inlined_call_operand.vmem [shape: bf16[128,128], index: 1, kind: input, shape index: {}]
  %s2 = inlined_call_operand.vmem [shape: bf16[128,128], index: 2, kind: input, shape index: {}]
  %s3 = inlined_call_operand.vmem [shape: bf16[128,128], index: 3, kind: input, shape index: {}]
  %s4 = inlined_call_operand.hbm [shape: bf16[128,128], index: 4, kind: input, shape index: {}]
  %s5 = inlined_call_operand.hbm [shape: bf16[128,128], index: 5, kind: input, shape index: {}]
  %s6 = inlined_call_operand.hbm [shape: bf16[128,128], index: 6, kind: input, shape index: {}]
  %s7 = inlined_call_operand.vmem [shape: f32[6,128], index: 7, kind: input, shape index: {}]
  %s8 = inlined_call_operand.hbm [shape: f32[2,1,128], index: 8, kind: output, shape index: {}]
  %s9 = sld [smem:[#allocation0]]
  $region85: #{encoder_forward.1} parent=0
    _
  %s11 = ssub.s32 1, %s9
  %s12 = scalar_select 0, %s11, %s9
  $region1: #{encoder_forward.1} parent=0
    #allocation3 [shape = 'u8[32768]{0}', space=vmem, size = 0x8000, scoped, tag = 'input window, operand 4, single buffered']
    #allocation4 [shape = 's32[2]{0}', space=sflag, size = 0x8, scoped, tag = 'scoped memory for encoder_forward.1']
    #allocation5 [shape = 's32[2]{0}', space=sflag, size = 0x8, scoped, tag = 'scoped memory for encoder_forward.1']
    #allocation6 [shape = 'u8[32768]{0}', space=vmem, size = 0x8000, scoped, tag = 'input window, operand 5, single buffered']
    #allocation7 [shape = 's32[1]{0}', space=sflag, size = 0x4, scoped, tag = 'scoped memory for encoder_forward.1']
    #allocation8 [shape = 'u8[32768]{0}', space=vmem, size = 0x8000, scoped, tag = 'input window, operand 6, single buffered']
    #allocation9 [shape = 'u8[1024]{0}', space=vmem, size = 0x400, scoped, tag = 'output window, operand 0']
    %13 = vsyncpa [#allocation4], 0
    %14 = vsyncpa [#allocation7], 0
    %15 = vsyncpa [#allocation5], 0
    %s16 = scalar_lea.sflag [#allocation5], 1
    %17 = vsyncpa %s16, 0
    loop: start=0, step=1, limit=6
    $region2: #{encoder_forward.1} parent=1 // loop_pre_header
      _
    $region3: #{encoder_forward.1} parent=1 // loop_header
      %s19 = sphi 0, %s23
      %p20 = scmp.ge.s32.totalorder %s19, 6
      %s26 = sphi 0, %s38
      %s27 = sphi 0, %s34
      %s28 = sphi 0, %s26
      %s29 = sphi 0, %s27
      %s30 = sphi 0, %s28
      %s31 = sphi 0, %s29
      %s43 = sphi 0, %s45
      %s46 = sphi 0, %s43
      %s47 = sphi 0, %s46
      %s63 = sphi 0, %s47
      %s67 = sphi 0, %s67
      %s69 = sphi 0, %s67
      %s70 = sphi 0, %s69
      %s84 = sphi 0, %s70
      %s88 = sphi 0, %s88
      %s90 = sphi 0, %s88
      %s91 = sphi 0, %s90
      %s105 = sphi 0, %s91
      %s109 = sphi 0, %s109
      %s111 = sphi 0, %s109
      %s112 = sphi 0, %s111
      %s126 = sphi 0, %s112
      %s130 = sphi 0, %s130
      %s132 = sphi 0, %s130
      %s133 = sphi 0, %s132
      %s147 = sphi 0, %s133
      %s151 = sphi 0, %s151
      %s153 = sphi 0, %s151
      %s154 = sphi 0, %s153
      %s168 = sphi 0, %s154
      %s172 = sphi 0, %s172
      %s174 = sphi 0, %s172
      %s175 = sphi 0, %s174
      %s189 = sphi 0, %s175
      %s193 = sphi 0, %s193
      %s195 = sphi 0, %s193
      %s196 = sphi 0, %s195
      %s210 = sphi 0, %s196
      %s216 = sphi 0, %s218
      %s219 = sphi 0, %s216
      %s220 = sphi 0, %s219
      %s236 = sphi 0, %s220
    $region4: #{encoder_forward.1} parent=1 // loop_header_branch
      %22 = sbr.rel (%p20) target = $region8
    $region5: #{encoder_forward.1} parent=1 // loop_body
      %s24 = ssub.s32 %s19, 1
      %s25 = ssub.s32 %s19, 2
      %s32 = sadd.s32 1, %s27
      %p33 = scmp.ge.s32.totalorder %s32, 2
      %s34 = scalar_select %p33, 0, %s32
      %s35 = sadd.s32 1, %s26
      %s36 = scalar_select %p33, %s35, %s26
      %p37 = scmp.ge.s32.totalorder %s36, 2
      %s38 = scalar_select %p37, 0, %s36
      %s39 = ssub.s32 %s26, %s38
      %s40 = ssub.s32 %s27, %s34
      %s41 = sor.u32 %s39, %s40
      %p42 = scmp.eq.s32.totalorder %s41, 0
      %s44 = sadd.s32 %s43, 1
      %s45 = scalar_select %p42, %s43, %s44
      %p48 = pneg %p42
      %p49 = scmp.eq.s32.totalorder %s19, 3
      %p50 = por %p48, %p49
      %p51 = scmp.ne.s32.totalorder %s43, %s46
      %p52 = scmp.eq.s32.totalorder %s19, 0
      %p53 = por %p51, %p52
      %p54 = scmp.ne.s32.totalorder %s43, %s46
      %p55 = scmp.eq.s32.totalorder %s24, 3
      %p56 = por %p54, %p55
      %p57 = scmp.ne.s32.totalorder %s46, %s47
      %p58 = scmp.eq.s32.totalorder %s24, 0
      %p59 = por %p57, %p58
      %p60 = scmp.ne.s32.totalorder %s46, %s47
      %p61 = scmp.eq.s32.totalorder %s25, 3
      %p62 = por %p60, %p61
      %p64 = scmp.ne.s32.totalorder %s47, %s63
      %p65 = scmp.eq.s32.totalorder %s25, 0
      %p66 = por %p64, %p65
      %s68 = sadd.s32 %s67, 1
      %p71 = scmp.eq.s32.totalorder %s19, 3
      %p72 = scmp.ne.s32.totalorder %s67, %s69
      %p73 = scmp.eq.s32.totalorder %s19, 0
      %p74 = por %p72, %p73
      %p75 = scmp.ne.s32.totalorder %s67, %s69
      %p76 = scmp.eq.s32.totalorder %s24, 3
      %p77 = por %p75, %p76
      %p78 = scmp.ne.s32.totalorder %s69, %s70
      %p79 = scmp.eq.s32.totalorder %s24, 0
      %p80 = por %p78, %p79
      %p81 = scmp.ne.s32.totalorder %s69, %s70
      %p82 = scmp.eq.s32.totalorder %s25, 3
      %p83 = por %p81, %p82
      %p85 = scmp.ne.s32.totalorder %s70, %s84
      %p86 = scmp.eq.s32.totalorder %s25, 0
      %p87 = por %p85, %p86
      %s89 = sadd.s32 %s88, 1
      %p92 = scmp.eq.s32.totalorder %s19, 3
      %p93 = scmp.ne.s32.totalorder %s88, %s90
      %p94 = scmp.eq.s32.totalorder %s19, 0
      %p95 = por %p93, %p94
      %p96 = scmp.ne.s32.totalorder %s88, %s90
      %p97 = scmp.eq.s32.totalorder %s24, 3
      %p98 = por %p96, %p97
      %p99 = scmp.ne.s32.totalorder %s90, %s91
      %p100 = scmp.eq.s32.totalorder %s24, 0
      %p101 = por %p99, %p100
      %p102 = scmp.ne.s32.totalorder %s90, %s91
      %p103 = scmp.eq.s32.totalorder %s25, 3
      %p104 = por %p102, %p103
      %p106 = scmp.ne.s32.totalorder %s91, %s105
      %p107 = scmp.eq.s32.totalorder %s25, 0
      %p108 = por %p106, %p107
      %s110 = sadd.s32 %s109, 1
      %p113 = scmp.eq.s32.totalorder %s19, 3
      %p114 = scmp.ne.s32.totalorder %s109, %s111
      %p115 = scmp.eq.s32.totalorder %s19, 0
      %p116 = por %p114, %p115
      %p117 = scmp.ne.s32.totalorder %s109, %s111
      %p118 = scmp.eq.s32.totalorder %s24, 3
      %p119 = por %p117, %p118
      %p120 = scmp.ne.s32.totalorder %s111, %s112
      %p121 = scmp.eq.s32.totalorder %s24, 0
      %p122 = por %p120, %p121
      %p123 = scmp.ne.s32.totalorder %s111, %s112
      %p124 = scmp.eq.s32.totalorder %s25, 3
      %p125 = por %p123, %p124
      %p127 = scmp.ne.s32.totalorder %s112, %s126
      %p128 = scmp.eq.s32.totalorder %s25, 0
      %p129 = por %p127, %p128
      %s131 = sadd.s32 %s130, 1
      %p134 = scmp.eq.s32.totalorder %s19, 3
      %p135 = scmp.ne.s32.totalorder %s130, %s132
      %p136 = scmp.eq.s32.totalorder %s19, 0
      %p137 = por %p135, %p136
      %p138 = scmp.ne.s32.totalorder %s130, %s132
      %p139 = scmp.eq.s32.totalorder %s24, 3
      %p140 = por %p138, %p139
      %p141 = scmp.ne.s32.totalorder %s132, %s133
      %p142 = scmp.eq.s32.totalorder %s24, 0
      %p143 = por %p141, %p142
      %p144 = scmp.ne.s32.totalorder %s132, %s133
      %p145 = scmp.eq.s32.totalorder %s25, 3
      %p146 = por %p144, %p145
      %p148 = scmp.ne.s32.totalorder %s133, %s147
      %p149 = scmp.eq.s32.totalorder %s25, 0
      %p150 = por %p148, %p149
      %s152 = sadd.s32 %s151, 1
      %p155 = scmp.eq.s32.totalorder %s19, 3
      %p156 = scmp.ne.s32.totalorder %s151, %s153
      %p157 = scmp.eq.s32.totalorder %s19, 0
      %p158 = por %p156, %p157
      %p159 = scmp.ne.s32.totalorder %s151, %s153
      %p160 = scmp.eq.s32.totalorder %s24, 3
      %p161 = por %p159, %p160
      %p162 = scmp.ne.s32.totalorder %s153, %s154
      %p163 = scmp.eq.s32.totalorder %s24, 0
      %p164 = por %p162, %p163
      %p165 = scmp.ne.s32.totalorder %s153, %s154
      %p166 = scmp.eq.s32.totalorder %s25, 3
      %p167 = por %p165, %p166
      %p169 = scmp.ne.s32.totalorder %s154, %s168
      %p170 = scmp.eq.s32.totalorder %s25, 0
      %p171 = por %p169, %p170
      %s173 = sadd.s32 %s172, 1
      %p176 = scmp.eq.s32.totalorder %s19, 3
      %p177 = scmp.ne.s32.totalorder %s172, %s174
      %p178 = scmp.eq.s32.totalorder %s19, 0
      %p179 = por %p177, %p178
      %p180 = scmp.ne.s32.totalorder %s172, %s174
      %p181 = scmp.eq.s32.totalorder %s24, 3
      %p182 = por %p180, %p181
      %p183 = scmp.ne.s32.totalorder %s174, %s175
      %p184 = scmp.eq.s32.totalorder %s24, 0
      %p185 = por %p183, %p184
      %p186 = scmp.ne.s32.totalorder %s174, %s175
      %p187 = scmp.eq.s32.totalorder %s25, 3
      %p188 = por %p186, %p187
      %p190 = scmp.ne.s32.totalorder %s175, %s189
      %p191 = scmp.eq.s32.totalorder %s25, 0
      %p192 = por %p190, %p191
      %s194 = sadd.s32 %s193, 1
      %p197 = scmp.eq.s32.totalorder %s19, 3
      %p198 = scmp.ne.s32.totalorder %s193, %s195
      %p199 = scmp.eq.s32.totalorder %s19, 0
      %p200 = por %p198, %p199
      %p201 = scmp.ne.s32.totalorder %s193, %s195
      %p202 = scmp.eq.s32.totalorder %s24, 3
      %p203 = por %p201, %p202
      %p204 = scmp.ne.s32.totalorder %s195, %s196
      %p205 = scmp.eq.s32.totalorder %s24, 0
      %p206 = por %p204, %p205
      %p207 = scmp.ne.s32.totalorder %s195, %s196
      %p208 = scmp.eq.s32.totalorder %s25, 3
      %p209 = por %p207, %p208
      %p211 = scmp.ne.s32.totalorder %s196, %s210
      %p212 = scmp.eq.s32.totalorder %s25, 0
      %p213 = por %p211, %p212
      %s214 = ssub.s32 %s26, %s38
      %p215 = scmp.eq.s32.totalorder %s214, 0
      %s217 = sadd.s32 %s216, 1
      %s218 = scalar_select %p215, %s216, %s217
      %p221 = pneg %p215
      %p222 = scmp.eq.s32.totalorder %s19, 3
      %p223 = por %p221, %p222
      %p224 = scmp.ne.s32.totalorder %s216, %s219
      %p225 = scmp.eq.s32.totalorder %s19, 0
      %p226 = por %p224, %p225
      %p227 = scmp.ne.s32.totalorder %s216, %s219
      %p228 = scmp.eq.s32.totalorder %s24, 3
      %p229 = por %p227, %p228
      %p230 = scmp.ne.s32.totalorder %s219, %s220
      %p231 = scmp.eq.s32.totalorder %s24, 0
      %p232 = por %p230, %p231
      %p233 = scmp.ne.s32.totalorder %s219, %s220
      %p234 = scmp.eq.s32.totalorder %s25, 3
      %p235 = por %p233, %p234
      %p237 = scmp.ne.s32.totalorder %s220, %s236
      %p238 = scmp.eq.s32.totalorder %s25, 0
      %p239 = por %p237, %p238
      %p240 = scmp.le.s32.totalorder 1, %s19
      %p241 = scmp.lt.s32.totalorder %s19, 5
      %p242 = pnand %p240, %p241
      %p243 = pneg %p242
      // Predicated region
      $region9: #{encoder_forward.1} parent=5 // pred_check
        _
      $region10: #{encoder_forward.1} parent=5 // pred_check_branch
        %245 = sbr.rel (%p242) target = $region12
      $region11: #{encoder_forward.1} parent=5 // pred_region
        %s246 = ssub.s32 %s19, 1
        // Predicated region
        $region13: #{encoder_forward.1} parent=11 // pred_check
          %p247 = pneg %p80
        $region14: #{encoder_forward.1} parent=11 // pred_check_branch
          %249 = sbr.rel (%p247) target = $region16
        $region15: #{encoder_forward.1} parent=11 // pred_region
          _
        $region16: #{encoder_forward.1} parent=11 // pred_fallthru
          _
        // Predicated region
        $region17: #{encoder_forward.1} parent=11 // pred_check
          %p250 = pneg %p101
        $region18: #{encoder_forward.1} parent=11 // pred_check_branch
          %252 = sbr.rel (%p250) target = $region20
        $region19: #{encoder_forward.1} parent=11 // pred_region
          _
        $region20: #{encoder_forward.1} parent=11 // pred_fallthru
          _
        // Predicated region
        $region21: #{encoder_forward.1} parent=11 // pred_check
          %p253 = pneg %p122
        $region22: #{encoder_forward.1} parent=11 // pred_check_branch
          %255 = sbr.rel (%p253) target = $region24
        $region23: #{encoder_forward.1} parent=11 // pred_region
          _
        $region24: #{encoder_forward.1} parent=11 // pred_fallthru
          _
        // Predicated region
        $region25: #{encoder_forward.1} parent=11 // pred_check
          %p256 = pneg %p143
        $region26: #{encoder_forward.1} parent=11 // pred_check_branch
          %258 = sbr.rel (%p256) target = $region28
        $region27: #{encoder_forward.1} parent=11 // pred_region
          %s260 = ssub.s32 1024, 1024
          %261 = vsyncadd [#allocation4], %s260
          %s262 = sshll.u32 [#allocation3], 4
          %s263 = int_to_ptr.vmem [resolvable:$true] %s262
          %268 = dma.hbm_to_vmem [thread:$0]  %s4, 1024, %s263, [#allocation4], 64, 64, 4
        $region28: #{encoder_forward.1} parent=11 // pred_fallthru
          _
        // Predicated region
        $region29: #{encoder_forward.1} parent=11 // pred_check
          %p269 = pneg %p164
        $region30: #{encoder_forward.1} parent=11 // pred_check_branch
          %271 = sbr.rel (%p269) target = $region32
        $region31: #{encoder_forward.1} parent=11 // pred_region
          %s273 = ssub.s32 1024, 1024
          %274 = vsyncadd [#allocation7], %s273
          %s275 = sshll.u32 [#allocation6], 4
          %s276 = int_to_ptr.vmem [resolvable:$true] %s275
          %281 = dma.hbm_to_vmem [thread:$0]  %s5, 1024, %s276, [#allocation7], 64, 64, 4
        $region32: #{encoder_forward.1} parent=11 // pred_fallthru
          _
        // Predicated region
        $region33: #{encoder_forward.1} parent=11 // pred_check
          %p282 = pneg %p185
        $region34: #{encoder_forward.1} parent=11 // pred_check_branch
          %284 = sbr.rel (%p282) target = $region36
        $region35: #{encoder_forward.1} parent=11 // pred_region
          %s286 = ssub.s32 1024, 1024
          %287 = vsyncadd [#allocation7], %s286
          %s288 = sshll.u32 [#allocation8], 4
          %s289 = int_to_ptr.vmem [resolvable:$true] %s288
          %294 = dma.hbm_to_vmem [thread:$0]  %s6, 1024, %s289, [#allocation7], 64, 64, 4
        $region36: #{encoder_forward.1} parent=11 // pred_fallthru
          _
        // Predicated region
        $region37: #{encoder_forward.1} parent=11 // pred_check
          %p295 = pneg %p206
        $region38: #{encoder_forward.1} parent=11 // pred_check_branch
          %297 = sbr.rel (%p295) target = $region40
        $region39: #{encoder_forward.1} parent=11 // pred_region
          _
        $region40: #{encoder_forward.1} parent=11 // pred_fallthru
          _
      $region12: #{encoder_forward.1} parent=5 // pred_fallthru
        _
      %p298 = scmp.lt.s32.totalorder %s19, 4
      // Predicated region
      $region41: #{encoder_forward.1} parent=5 // pred_check
        %p299 = pneg %p298
      $region42: #{encoder_forward.1} parent=5 // pred_check_branch
        %301 = sbr.rel (%p299) target = $region44
      $region43: #{encoder_forward.1} parent=5 // pred_region
        // Predicated region
        $region45: #{encoder_forward.1} parent=43 // pred_check
          %p302 = pneg %p53
        $region46: #{encoder_forward.1} parent=43 // pred_check_branch
          %304 = sbr.rel (%p302) target = $region48
        $region47: #{encoder_forward.1} parent=43 // pred_region
          %s305 = smul.u32 2, %s27
          %p306 = scmp.lt.s32.totalorder %s26, 1
          %s307 = scalar_select %p306, %s26, 1
          %p308 = scmp.lt.s32.totalorder %s305, 3
          %s309 = scalar_select %p308, %s305, 3
          %s310 = smul.addr %s307, 4
          %s311 = sadd.s32 %s309, %s310
          %s312 = smul.addr %s311, 4
          %s313 = scalar_lea.vmem %s0, %s312
          %s314 = smul.u32 2, %s27
        $region48: #{encoder_forward.1} parent=43 // pred_fallthru
          _
      $region44: #{encoder_forward.1} parent=5 // pred_fallthru
        _
      %p315 = scmp.le.s32.totalorder 1, %s19
      %p316 = scmp.lt.s32.totalorder %s19, 5
      %p317 = pnand %p315, %p316
      %p318 = pneg %p317
      // Predicated region
      $region49: #{encoder_forward.1} parent=5 // pred_check
        _
      $region50: #{encoder_forward.1} parent=5 // pred_check_branch
        %320 = sbr.rel (%p317) target = $region52
      $region51: #{encoder_forward.1} parent=5 // pred_region
        %s321 = ssub.s32 %s19, 1
        // Predicated region
        $region53: #{encoder_forward.1} parent=51 // pred_check
          %p322 = pneg %p143
        $region54: #{encoder_forward.1} parent=51 // pred_check_branch
          %324 = sbr.rel (%p322) target = $region56
        $region55: #{encoder_forward.1} parent=51 // pred_region
          %325 = dma.done [#allocation4], 1024
        $region56: #{encoder_forward.1} parent=51 // pred_fallthru
          _
        // Predicated region
        $region57: #{encoder_forward.1} parent=51 // pred_check
          %p326 = pneg %p164
        $region58: #{encoder_forward.1} parent=51 // pred_check_branch
          %328 = sbr.rel (%p326) target = $region60
        $region59: #{encoder_forward.1} parent=51 // pred_region
          %329 = dma.done [#allocation7], 1024
        $region60: #{encoder_forward.1} parent=51 // pred_fallthru
          _
        // Predicated region
        $region61: #{encoder_forward.1} parent=51 // pred_check
          %p330 = pneg %p185
        $region62: #{encoder_forward.1} parent=51 // pred_check_branch
          %332 = sbr.rel (%p330) target = $region64
        $region63: #{encoder_forward.1} parent=51 // pred_region
          %333 = dma.done [#allocation7], 1024
        $region64: #{encoder_forward.1} parent=51 // pred_fallthru
          _
        %s334 = smul.u32 2, %s29
        %p335 = scmp.lt.s32.totalorder %s28, 1
        %s336 = scalar_select %p335, %s28, 1
        %p337 = scmp.lt.s32.totalorder %s334, 3
        %s338 = scalar_select %p337, %s334, 3
        %s339 = smul.addr %s336, 4
        %s340 = sadd.s32 %s338, %s339
        %s341 = smul.addr %s340, 4
        %s342 = scalar_lea.vmem %s0, %s341
        %p343 = pneg %p59
        %p344 = pneg %p56
        %p345 = pneg %p80
        %p346 = pneg %p77
        %p347 = pneg %p101
        %p348 = pneg %p98
        %p349 = pneg %p122
        %p350 = pneg %p119
        %p351 = pneg %p143
        %p352 = pneg %p140
        %p353 = pneg %p164
        %p354 = pneg %p161
        %p355 = pneg %p185
        %p356 = pneg %p182
        %p357 = pneg %p206
        %p358 = pneg %p203
        %p359 = pneg %p232
        %p360 = pneg %p229
        %s361 = sand.u32 %s219, 1
        %s362 = scalar_lea.sflag [#allocation5], %s361
        %s363 = sand.u32 %s219, 1
        %s364 = scalar_lea.vmem [#allocation9], %s363
        %s365 = smul.u32 2, %s29
        %p366 = scmp.lt.s32.totalorder %s28, 1
        %s367 = scalar_select %p366, %s28, 1
        %p368 = scmp.lt.s32.totalorder %s365, 3
        %s369 = scalar_select %p368, %s365, 3
        %s370 = smul.addr %s367, 4
        %s371 = sadd.s32 %s369, %s370
        %s372 = smul.addr %s371, 4
        %s373 = scalar_lea.vmem %s0, %s372
        %s374 = smul.u32 2, %s29
        %p376 = scmp.eq.s32.totalorder %s29, 0
        // Predicated region
        $region65: #{encoder_forward.1} parent=51 // pred_check
          %p377 = pneg %p376
        $region66: #{encoder_forward.1} parent=51 // pred_check_branch
          %379 = sbr.rel (%p377) target = $region68
        $region67: #{encoder_forward.1} parent=51 // pred_region
          %380 = vst [vmem:[#allocation2] sm:$0x1] -inf
        $region68: #{encoder_forward.1} parent=51 // pred_fallthru
          _
        %v381 = vld [vmem:[%s373] sm:$0xf]
        %v382 = vld [vmem:[%s373 + $0x4] sm:$0xf]
        %v383 = vld [vmem:[%s1] sm:$0xf]
        %v384 = vld [vmem:[%s1 + $0x4] sm:$0xf]
        %v385 = vld [vmem:[%s1 + $0x8] sm:$0xf]
        %v386 = vld [vmem:[%s1 + $0xc] sm:$0xf]
        %v387 = vld [vmem:[%s1 + $0x10] sm:$0xf]
        %v388 = vld [vmem:[%s1 + $0x14] sm:$0xf]
        %v389 = vld [vmem:[%s1 + $0x18] sm:$0xf]
        %v390 = vld [vmem:[%s1 + $0x1c] sm:$0xf]
        %v391 = vld [vmem:[%s1 + $0x20] sm:$0xf]
        %v392 = vld [vmem:[%s1 + $0x24] sm:$0xf]
        %v393 = vld [vmem:[%s1 + $0x28] sm:$0xf]
        %v394 = vld [vmem:[%s1 + $0x2c] sm:$0xf]
        %v395 = vld [vmem:[%s1 + $0x30] sm:$0xf]
        %v396 = vld [vmem:[%s1 + $0x34] sm:$0xf]
        %v397 = vld [vmem:[%s1 + $0x38] sm:$0xf]
        %v398 = vld [vmem:[%s1 + $0x3c] sm:$0xf]
        %v399 = vld [vmem:[%s7] sm:$0x1]
        %v400 = vlaneseq
        %v401 = vshrl.u32 %v400, 7
        %v402 = vsub.s32 0, %v401
        %v403 = vrot.slane %v399, %v402
        %v406 = vunpack.c.l.b16 %v381
        %v407 = vunpack.c.l.b16 %v382
        %v408 = vpack.c.b16 %v407, %v406
        %v426 = vunpack.c.l.b16 %v383
        %v427 = vunpack.c.l.b16 %v384
        %v428 = vunpack.c.l.b16 %v385
        %v429 = vunpack.c.l.b16 %v386
        %v430 = vunpack.c.l.b16 %v387
        %v431 = vunpack.c.l.b16 %v388
        %v432 = vunpack.c.l.b16 %v389
        %v433 = vunpack.c.l.b16 %v390
        %v434 = vunpack.c.l.b16 %v391
        %v435 = vunpack.c.l.b16 %v392
        %v436 = vunpack.c.l.b16 %v393
        %v437 = vunpack.c.l.b16 %v394
        %v438 = vunpack.c.l.b16 %v395
        %v439 = vunpack.c.l.b16 %v396
        %v440 = vunpack.c.l.b16 %v397
        %v441 = vunpack.c.l.b16 %v398
        %v442 = vpack.c.b16 %v427, %v426
        %v443 = vpack.c.b16 %v429, %v428
        %v444 = vpack.c.b16 %v431, %v430
        %v445 = vpack.c.b16 %v433, %v432
        %v446 = vpack.c.b16 %v435, %v434
        %v447 = vpack.c.b16 %v437, %v436
        %v448 = vpack.c.b16 %v439, %v438
        %v449 = vpack.c.b16 %v441, %v440
        %458 = vmatprep.subr.bf16.mxu0 0
        %459 = vmatpush1.bf16.msra.mxu0 %v449
        %460 = vmatprep.subr.bf16.mxu0 0
        %461 = vmatpush1.bf16.msra.mxu0 %v448
        %462 = vmatprep.subr.bf16.mxu0 0
        %463 = vmatpush1.bf16.msra.mxu0 %v447
        %464 = vmatprep.subr.bf16.mxu0 0
        %465 = vmatpush1.bf16.msra.mxu0 %v446
        %466 = vmatprep.subr.bf16.mxu0 0
        %467 = vmatpush1.bf16.msra.mxu0 %v445
        %468 = vmatprep.subr.bf16.mxu0 0
        %469 = vmatpush1.bf16.msra.mxu0 %v444
        %470 = vmatprep.subr.bf16.mxu0 0
        %471 = vmatpush1.bf16.msra.mxu0 %v443
        %472 = vmatprep.subr.bf16.mxu0 0
        %473 = vmatpush1.bf16.msra.mxu0 %v442
        %474 = vmatprep.subr.bf16.mxu0 0
        %475 = vmatpush2.bf16.msra.mxu0 0
        %476 = vmatprep.subr.bf16.mxu0 0
        %477 = vmatpush2.bf16.msra.mxu0 0
        %478 = vmatprep.subr.bf16.mxu0 0
        %479 = vmatpush2.bf16.msra.mxu0 0
        %480 = vmatprep.subr.bf16.mxu0 0
        %481 = vmatpush2.bf16.msra.mxu0 0
        %482 = vmatprep.subr.bf16.mxu0 0
        %483 = vmatpush2.bf16.msra.mxu0 0
        %484 = vmatprep.subr.bf16.mxu0 0
        %485 = vmatpush2.bf16.msra.mxu0 0
        %486 = vmatprep.subr.bf16.mxu0 0
        %487 = vmatpush2.bf16.msra.mxu0 0
        %488 = vmatprep.subr.bf16.mxu0 0
        %489 = vmatpush2.bf16.msra.mxu0 0
        %490 = vmatprep.mubr.bf16.mxu0 0
        %491 = vmatmul.mubr.bf16.gmra.mxu0 %v408
        %v492 = vpop.f32.mrf.mxu0
        %v493 = vadd.f32 %v403, %v492
        %v494 = vpop.f32.mrf.mxu0
        %v495 = vpop.f32.mrf.mxu0
        %v496 = vadd.f32 %v403, %v495
        %v497 = vpop.f32.mrf.mxu0
        %498 = vdwg.mxu0
        %v499 = vmax.f32 %v493, 0.0
        %v500 = vmax.f32 %v496, 0.0
        %v501 = vpack.c.bf16 %v500, %v499
        %v502 = vld [vmem:[%s2] sm:$0xf]
        %v503 = vld [vmem:[%s2 + $0x4] sm:$0xf]
        %v504 = vld [vmem:[%s2 + $0x8] sm:$0xf]
        %v505 = vld [vmem:[%s2 + $0xc] sm:$0xf]
        %v506 = vld [vmem:[%s2 + $0x10] sm:$0xf]
        %v507 = vld [vmem:[%s2 + $0x14] sm:$0xf]
        %v508 = vld [vmem:[%s2 + $0x18] sm:$0xf]
        %v509 = vld [vmem:[%s2 + $0x1c] sm:$0xf]
        %v510 = vld [vmem:[%s2 + $0x20] sm:$0xf]
        %v511 = vld [vmem:[%s2 + $0x24] sm:$0xf]
        %v512 = vld [vmem:[%s2 + $0x28] sm:$0xf]
        %v513 = vld [vmem:[%s2 + $0x2c] sm:$0xf]
        %v514 = vld [vmem:[%s2 + $0x30] sm:$0xf]
        %v515 = vld [vmem:[%s2 + $0x34] sm:$0xf]
        %v516 = vld [vmem:[%s2 + $0x38] sm:$0xf]
        %v517 = vld [vmem:[%s2 + $0x3c] sm:$0xf]
        %v518 = vld [vmem:[%s7 + $0x1] sm:$0x1]
        %v519 = vlaneseq
        %v520 = vshrl.u32 %v519, 7
        %v521 = vsub.s32 0, %v520
        %v522 = vrot.slane %v518, %v521
        %v539 = vunpack.c.l.b16 %v502
        %v540 = vunpack.c.l.b16 %v503
        %v541 = vunpack.c.l.b16 %v504
        %v542 = vunpack.c.l.b16 %v505
        %v543 = vunpack.c.l.b16 %v506
        %v544 = vunpack.c.l.b16 %v507
        %v545 = vunpack.c.l.b16 %v508
        %v546 = vunpack.c.l.b16 %v509
        %v547 = vunpack.c.l.b16 %v510
        %v548 = vunpack.c.l.b16 %v511
        %v549 = vunpack.c.l.b16 %v512
        %v550 = vunpack.c.l.b16 %v513
        %v551 = vunpack.c.l.b16 %v514
        %v552 = vunpack.c.l.b16 %v515
        %v553 = vunpack.c.l.b16 %v516
        %v554 = vunpack.c.l.b16 %v517
        %v555 = vpack.c.b16 %v540, %v539
        %v556 = vpack.c.b16 %v542, %v541
        %v557 = vpack.c.b16 %v544, %v543
        %v558 = vpack.c.b16 %v546, %v545
        %v559 = vpack.c.b16 %v548, %v547
        %v560 = vpack.c.b16 %v550, %v549
        %v561 = vpack.c.b16 %v552, %v551
        %v562 = vpack.c.b16 %v554, %v553
        %571 = vmatprep.subr.bf16.mxu0 0
        %572 = vmatpush1.bf16.msra.mxu0 %v562
        %573 = vmatprep.subr.bf16.mxu0 0
        %574 = vmatpush1.bf16.msra.mxu0 %v561
        %575 = vmatprep.subr.bf16.mxu0 0
        %576 = vmatpush1.bf16.msra.mxu0 %v560
        %577 = vmatprep.subr.bf16.mxu0 0
        %578 = vmatpush1.bf16.msra.mxu0 %v559
        %579 = vmatprep.subr.bf16.mxu0 0
        %580 = vmatpush1.bf16.msra.mxu0 %v558
        %581 = vmatprep.subr.bf16.mxu0 0
        %582 = vmatpush1.bf16.msra.mxu0 %v557
        %583 = vmatprep.subr.bf16.mxu0 0
        %584 = vmatpush1.bf16.msra.mxu0 %v556
        %585 = vmatprep.subr.bf16.mxu0 0
        %586 = vmatpush1.bf16.msra.mxu0 %v555
        %587 = vmatprep.subr.bf16.mxu0 0
        %588 = vmatpush2.bf16.msra.mxu0 0
        %589 = vmatprep.subr.bf16.mxu0 0
        %590 = vmatpush2.bf16.msra.mxu0 0
        %591 = vmatprep.subr.bf16.mxu0 0
        %592 = vmatpush2.bf16.msra.mxu0 0
        %593 = vmatprep.subr.bf16.mxu0 0
        %594 = vmatpush2.bf16.msra.mxu0 0
        %595 = vmatprep.subr.bf16.mxu0 0
        %596 = vmatpush2.bf16.msra.mxu0 0
        %597 = vmatprep.subr.bf16.mxu0 0
        %598 = vmatpush2.bf16.msra.mxu0 0
        %599 = vmatprep.subr.bf16.mxu0 0
        %600 = vmatpush2.bf16.msra.mxu0 0
        %601 = vmatprep.subr.bf16.mxu0 0
        %602 = vmatpush2.bf16.msra.mxu0 0
        %603 = vmatprep.mubr.bf16.mxu0 0
        %604 = vmatmul.mubr.bf16.gmra.mxu0 %v501
        %v605 = vpop.f32.mrf.mxu0
        %v606 = vadd.f32 %v522, %v605
        %v607 = vpop.f32.mrf.mxu0
        %v608 = vpop.f32.mrf.mxu0
        %v609 = vadd.f32 %v522, %v608
        %v610 = vpop.f32.mrf.mxu0
        %611 = vdwg.mxu0
        %v612 = vmax.f32 %v606, 0.0
        %v613 = vmax.f32 %v609, 0.0
        %v614 = vpack.c.bf16 %v613, %v612
        %v615 = vld [vmem:[%s3] sm:$0xf]
        %v616 = vld [vmem:[%s3 + $0x4] sm:$0xf]
        %v617 = vld [vmem:[%s3 + $0x8] sm:$0xf]
        %v618 = vld [vmem:[%s3 + $0xc] sm:$0xf]
        %v619 = vld [vmem:[%s3 + $0x10] sm:$0xf]
        %v620 = vld [vmem:[%s3 + $0x14] sm:$0xf]
        %v621 = vld [vmem:[%s3 + $0x18] sm:$0xf]
        %v622 = vld [vmem:[%s3 + $0x1c] sm:$0xf]
        %v623 = vld [vmem:[%s3 + $0x20] sm:$0xf]
        %v624 = vld [vmem:[%s3 + $0x24] sm:$0xf]
        %v625 = vld [vmem:[%s3 + $0x28] sm:$0xf]
        %v626 = vld [vmem:[%s3 + $0x2c] sm:$0xf]
        %v627 = vld [vmem:[%s3 + $0x30] sm:$0xf]
        %v628 = vld [vmem:[%s3 + $0x34] sm:$0xf]
        %v629 = vld [vmem:[%s3 + $0x38] sm:$0xf]
        %v630 = vld [vmem:[%s3 + $0x3c] sm:$0xf]
        %v631 = vld [vmem:[%s7 + $0x2] sm:$0x1]
        %v632 = vlaneseq
        %v633 = vshrl.u32 %v632, 7
        %v634 = vsub.s32 0, %v633
        %v635 = vrot.slane %v631, %v634
        %v652 = vunpack.c.l.b16 %v615
        %v653 = vunpack.c.l.b16 %v616
        %v654 = vunpack.c.l.b16 %v617
        %v655 = vunpack.c.l.b16 %v618
        %v656 = vunpack.c.l.b16 %v619
        %v657 = vunpack.c.l.b16 %v620
        %v658 = vunpack.c.l.b16 %v621
        %v659 = vunpack.c.l.b16 %v622
        %v660 = vunpack.c.l.b16 %v623
        %v661 = vunpack.c.l.b16 %v624
        %v662 = vunpack.c.l.b16 %v625
        %v663 = vunpack.c.l.b16 %v626
        %v664 = vunpack.c.l.b16 %v627
        %v665 = vunpack.c.l.b16 %v628
        %v666 = vunpack.c.l.b16 %v629
        %v667 = vunpack.c.l.b16 %v630
        %v668 = vpack.c.b16 %v653, %v652
        %v669 = vpack.c.b16 %v655, %v654
        %v670 = vpack.c.b16 %v657, %v656
        %v671 = vpack.c.b16 %v659, %v658
        %v672 = vpack.c.b16 %v661, %v660
        %v673 = vpack.c.b16 %v663, %v662
        %v674 = vpack.c.b16 %v665, %v664
        %v675 = vpack.c.b16 %v667, %v666
        %684 = vmatprep.subr.bf16.mxu0 0
        %685 = vmatpush1.bf16.msra.mxu0 %v675
        %686 = vmatprep.subr.bf16.mxu0 0
        %687 = vmatpush1.bf16.msra.mxu0 %v674
        %688 = vmatprep.subr.bf16.mxu0 0
        %689 = vmatpush1.bf16.msra.mxu0 %v673
        %690 = vmatprep.subr.bf16.mxu0 0
        %691 = vmatpush1.bf16.msra.mxu0 %v672
        %692 = vmatprep.subr.bf16.mxu0 0
        %693 = vmatpush1.bf16.msra.mxu0 %v671
        %694 = vmatprep.subr.bf16.mxu0 0
        %695 = vmatpush1.bf16.msra.mxu0 %v670
        %696 = vmatprep.subr.bf16.mxu0 0
        %697 = vmatpush1.bf16.msra.mxu0 %v669
        %698 = vmatprep.subr.bf16.mxu0 0
        %699 = vmatpush1.bf16.msra.mxu0 %v668
        %700 = vmatprep.subr.bf16.mxu0 0
        %701 = vmatpush2.bf16.msra.mxu0 0
        %702 = vmatprep.subr.bf16.mxu0 0
        %703 = vmatpush2.bf16.msra.mxu0 0
        %704 = vmatprep.subr.bf16.mxu0 0
        %705 = vmatpush2.bf16.msra.mxu0 0
        %706 = vmatprep.subr.bf16.mxu0 0
        %707 = vmatpush2.bf16.msra.mxu0 0
        %708 = vmatprep.subr.bf16.mxu0 0
        %709 = vmatpush2.bf16.msra.mxu0 0
        %710 = vmatprep.subr.bf16.mxu0 0
        %711 = vmatpush2.bf16.msra.mxu0 0
        %712 = vmatprep.subr.bf16.mxu0 0
        %713 = vmatpush2.bf16.msra.mxu0 0
        %714 = vmatprep.subr.bf16.mxu0 0
        %715 = vmatpush2.bf16.msra.mxu0 0
        %716 = vmatprep.mubr.bf16.mxu0 0
        %717 = vmatmul.mubr.bf16.gmra.mxu0 %v614
        %v718 = vpop.f32.mrf.mxu0
        %v719 = vadd.f32 %v635, %v718
        %v720 = vpop.f32.mrf.mxu0
        %v721 = vpop.f32.mrf.mxu0
        %v722 = vadd.f32 %v635, %v721
        %v723 = vpop.f32.mrf.mxu0
        %724 = vdwg.mxu0
        %v725 = vmax.f32 %v719, 0.0
        %v726 = vmax.f32 %v722, 0.0
        %v727 = vld [vmem:[#allocation2] sm:$0x1]
        %v728 = vmax.f32 %v725, %v726
        %v729 = vrot.slane %v728, 4
        %v730 = vmax.f32 %v728, %v729
        %v731 = vrot.slane %v730, 2
        %v732 = vmax.f32 %v730, %v731
        %v733 = vrot.slane %v732, 1
        %v734 = vmax.f32 %v732, %v733
        %v735 = vmax.f32 %v727, %v734
        %736 = vst [vmem:[#allocation2] sm:$0x1] %v735
        %p737 = scmp.eq.s32.totalorder %s29, 1
        // Predicated region
        $region69: #{encoder_forward.1} parent=51 // pred_check
          %p738 = pneg %p737
        $region70: #{encoder_forward.1} parent=51 // pred_check_branch
          %740 = sbr.rel (%p738) target = $region72
        $region71: #{encoder_forward.1} parent=51 // pred_region
          %v741 = vld [vmem:[#allocation2] sm:$0x1]
          %v742 = vpack.c.bf16 %v741, %v741
          %v743 = vld [vmem:[#allocation3] sm:$0xf]
          %v744 = vld [vmem:[#allocation3 + $0x4] sm:$0xf]
          %v745 = vld [vmem:[#allocation3 + $0x8] sm:$0xf]
          %v746 = vld [vmem:[#allocation3 + $0xc] sm:$0xf]
          %v747 = vld [vmem:[#allocation3 + $0x10] sm:$0xf]
          %v748 = vld [vmem:[#allocation3 + $0x14] sm:$0xf]
          %v749 = vld [vmem:[#allocation3 + $0x18] sm:$0xf]
          %v750 = vld [vmem:[#allocation3 + $0x1c] sm:$0xf]
          %v751 = vld [vmem:[#allocation3 + $0x20] sm:$0xf]
          %v752 = vld [vmem:[#allocation3 + $0x24] sm:$0xf]
          %v753 = vld [vmem:[#allocation3 + $0x28] sm:$0xf]
          %v754 = vld [vmem:[#allocation3 + $0x2c] sm:$0xf]
          %v755 = vld [vmem:[#allocation3 + $0x30] sm:$0xf]
          %v756 = vld [vmem:[#allocation3 + $0x34] sm:$0xf]
          %v757 = vld [vmem:[#allocation3 + $0x38] sm:$0xf]
          %v758 = vld [vmem:[#allocation3 + $0x3c] sm:$0xf]
          %v759 = vld [vmem:[%s7 + $0x3] sm:$0x1]
          %v776 = vunpack.c.l.b16 %v743
          %v777 = vunpack.c.l.b16 %v744
          %v778 = vunpack.c.l.b16 %v745
          %v779 = vunpack.c.l.b16 %v746
          %v780 = vunpack.c.l.b16 %v747
          %v781 = vunpack.c.l.b16 %v748
          %v782 = vunpack.c.l.b16 %v749
          %v783 = vunpack.c.l.b16 %v750
          %v784 = vunpack.c.l.b16 %v751
          %v785 = vunpack.c.l.b16 %v752
          %v786 = vunpack.c.l.b16 %v753
          %v787 = vunpack.c.l.b16 %v754
          %v788 = vunpack.c.l.b16 %v755
          %v789 = vunpack.c.l.b16 %v756
          %v790 = vunpack.c.l.b16 %v757
          %v791 = vunpack.c.l.b16 %v758
          %v792 = vpack.c.b16 %v777, %v776
          %v793 = vpack.c.b16 %v779, %v778
          %v794 = vpack.c.b16 %v781, %v780
          %v795 = vpack.c.b16 %v783, %v782
          %v796 = vpack.c.b16 %v785, %v784
          %v797 = vpack.c.b16 %v787, %v786
          %v798 = vpack.c.b16 %v789, %v788
          %v799 = vpack.c.b16 %v791, %v790
          %808 = vmatprep.subr.bf16.mxu0 0
          %809 = vmatpush1.bf16.msra.mxu0 %v799
          %810 = vmatprep.subr.bf16.mxu0 0
          %811 = vmatpush1.bf16.msra.mxu0 %v798
          %812 = vmatprep.subr.bf16.mxu0 0
          %813 = vmatpush1.bf16.msra.mxu0 %v797
          %814 = vmatprep.subr.bf16.mxu0 0
          %815 = vmatpush1.bf16.msra.mxu0 %v796
          %816 = vmatprep.subr.bf16.mxu0 0
          %817 = vmatpush1.bf16.msra.mxu0 %v795
          %818 = vmatprep.subr.bf16.mxu0 0
          %819 = vmatpush1.bf16.msra.mxu0 %v794
          %820 = vmatprep.subr.bf16.mxu0 0
          %821 = vmatpush1.bf16.msra.mxu0 %v793
          %822 = vmatprep.subr.bf16.mxu0 0
          %823 = vmatpush1.bf16.msra.mxu0 %v792
          %824 = vmatprep.subr.bf16.mxu0 0
          %825 = vmatpush2.bf16.msra.mxu0 0
          %826 = vmatprep.subr.bf16.mxu0 0
          %827 = vmatpush2.bf16.msra.mxu0 0
          %828 = vmatprep.subr.bf16.mxu0 0
          %829 = vmatpush2.bf16.msra.mxu0 0
          %830 = vmatprep.subr.bf16.mxu0 0
          %831 = vmatpush2.bf16.msra.mxu0 0
          %832 = vmatprep.subr.bf16.mxu0 0
          %833 = vmatpush2.bf16.msra.mxu0 0
          %834 = vmatprep.subr.bf16.mxu0 0
          %835 = vmatpush2.bf16.msra.mxu0 0
          %836 = vmatprep.subr.bf16.mxu0 0
          %837 = vmatpush2.bf16.msra.mxu0 0
          %838 = vmatprep.subr.bf16.mxu0 0
          %839 = vmatpush2.bf16.msra.mxu0 0
          %840 = vmatprep.mubr.bf16.mxu0 0
          %841 = vmatmul.mubr.bf16.gmra.mxu0 %v742
          %v842 = vpop.f32.mrf.mxu0
          %v843 = vadd.f32 %v759, %v842
          %v844 = vpop.f32.mrf.mxu0
          %v845 = vpop.f32.mrf.mxu0
          %v846 = vpop.f32.mrf.mxu0
          %847 = vdwg.mxu0
          %v848 = vmax.f32 %v843, 0.0
          %v849 = vpack.c.bf16 %v848, %v848
          %v850 = vld [vmem:[#allocation6] sm:$0xf]
          %v851 = vld [vmem:[#allocation6 + $0x4] sm:$0xf]
          %v852 = vld [vmem:[#allocation6 + $0x8] sm:$0xf]
          %v853 = vld [vmem:[#allocation6 + $0xc] sm:$0xf]
          %v854 = vld [vmem:[#allocation6 + $0x10] sm:$0xf]
          %v855 = vld [vmem:[#allocation6 + $0x14] sm:$0xf]
          %v856 = vld [vmem:[#allocation6 + $0x18] sm:$0xf]
          %v857 = vld [vmem:[#allocation6 + $0x1c] sm:$0xf]
          %v858 = vld [vmem:[#allocation6 + $0x20] sm:$0xf]
          %v859 = vld [vmem:[#allocation6 + $0x24] sm:$0xf]
          %v860 = vld [vmem:[#allocation6 + $0x28] sm:$0xf]
          %v861 = vld [vmem:[#allocation6 + $0x2c] sm:$0xf]
          %v862 = vld [vmem:[#allocation6 + $0x30] sm:$0xf]
          %v863 = vld [vmem:[#allocation6 + $0x34] sm:$0xf]
          %v864 = vld [vmem:[#allocation6 + $0x38] sm:$0xf]
          %v865 = vld [vmem:[#allocation6 + $0x3c] sm:$0xf]
          %v866 = vld [vmem:[%s7 + $0x4] sm:$0x1]
          %v883 = vunpack.c.l.b16 %v850
          %v884 = vunpack.c.l.b16 %v851
          %v885 = vunpack.c.l.b16 %v852
          %v886 = vunpack.c.l.b16 %v853
          %v887 = vunpack.c.l.b16 %v854
          %v888 = vunpack.c.l.b16 %v855
          %v889 = vunpack.c.l.b16 %v856
          %v890 = vunpack.c.l.b16 %v857
          %v891 = vunpack.c.l.b16 %v858
          %v892 = vunpack.c.l.b16 %v859
          %v893 = vunpack.c.l.b16 %v860
          %v894 = vunpack.c.l.b16 %v861
          %v895 = vunpack.c.l.b16 %v862
          %v896 = vunpack.c.l.b16 %v863
          %v897 = vunpack.c.l.b16 %v864
          %v898 = vunpack.c.l.b16 %v865
          %v899 = vpack.c.b16 %v884, %v883
          %v900 = vpack.c.b16 %v886, %v885
          %v901 = vpack.c.b16 %v888, %v887
          %v902 = vpack.c.b16 %v890, %v889
          %v903 = vpack.c.b16 %v892, %v891
          %v904 = vpack.c.b16 %v894, %v893
          %v905 = vpack.c.b16 %v896, %v895
          %v906 = vpack.c.b16 %v898, %v897
          %915 = vmatprep.subr.bf16.mxu0 0
          %916 = vmatpush1.bf16.msra.mxu0 %v906
          %917 = vmatprep.subr.bf16.mxu0 0
          %918 = vmatpush1.bf16.msra.mxu0 %v905
          %919 = vmatprep.subr.bf16.mxu0 0
          %920 = vmatpush1.bf16.msra.mxu0 %v904
          %921 = vmatprep.subr.bf16.mxu0 0
          %922 = vmatpush1.bf16.msra.mxu0 %v903
          %923 = vmatprep.subr.bf16.mxu0 0
          %924 = vmatpush1.bf16.msra.mxu0 %v902
          %925 = vmatprep.subr.bf16.mxu0 0
          %926 = vmatpush1.bf16.msra.mxu0 %v901
          %927 = vmatprep.subr.bf16.mxu0 0
          %928 = vmatpush1.bf16.msra.mxu0 %v900
          %929 = vmatprep.subr.bf16.mxu0 0
          %930 = vmatpush1.bf16.msra.mxu0 %v899
          %931 = vmatprep.subr.bf16.mxu0 0
          %932 = vmatpush2.bf16.msra.mxu0 0
          %933 = vmatprep.subr.bf16.mxu0 0
          %934 = vmatpush2.bf16.msra.mxu0 0
          %935 = vmatprep.subr.bf16.mxu0 0
          %936 = vmatpush2.bf16.msra.mxu0 0
          %937 = vmatprep.subr.bf16.mxu0 0
          %938 = vmatpush2.bf16.msra.mxu0 0
          %939 = vmatprep.subr.bf16.mxu0 0
          %940 = vmatpush2.bf16.msra.mxu0 0
          %941 = vmatprep.subr.bf16.mxu0 0
          %942 = vmatpush2.bf16.msra.mxu0 0
          %943 = vmatprep.subr.bf16.mxu0 0
          %944 = vmatpush2.bf16.msra.mxu0 0
          %945 = vmatprep.subr.bf16.mxu0 0
          %946 = vmatpush2.bf16.msra.mxu0 0
          %947 = vmatprep.mubr.bf16.mxu0 0
          %948 = vmatmul.mubr.bf16.gmra.mxu0 %v849
          %v949 = vpop.f32.mrf.mxu0
          %v950 = vadd.f32 %v866, %v949
          %v951 = vpop.f32.mrf.mxu0
          %v952 = vpop.f32.mrf.mxu0
          %v953 = vpop.f32.mrf.mxu0
          %954 = vdwg.mxu0
          %v955 = vmax.f32 %v950, 0.0
          %v956 = vpack.c.bf16 %v955, %v955
          %v957 = vld [vmem:[#allocation8] sm:$0xf]
          %v958 = vld [vmem:[#allocation8 + $0x4] sm:$0xf]
          %v959 = vld [vmem:[#allocation8 + $0x8] sm:$0xf]
          %v960 = vld [vmem:[#allocation8 + $0xc] sm:$0xf]
          %v961 = vld [vmem:[#allocation8 + $0x10] sm:$0xf]
          %v962 = vld [vmem:[#allocation8 + $0x14] sm:$0xf]
          %v963 = vld [vmem:[#allocation8 + $0x18] sm:$0xf]
          %v964 = vld [vmem:[#allocation8 + $0x1c] sm:$0xf]
          %v965 = vld [vmem:[#allocation8 + $0x20] sm:$0xf]
          %v966 = vld [vmem:[#allocation8 + $0x24] sm:$0xf]
          %v967 = vld [vmem:[#allocation8 + $0x28] sm:$0xf]
          %v968 = vld [vmem:[#allocation8 + $0x2c] sm:$0xf]
          %v969 = vld [vmem:[#allocation8 + $0x30] sm:$0xf]
          %v970 = vld [vmem:[#allocation8 + $0x34] sm:$0xf]
          %v971 = vld [vmem:[#allocation8 + $0x38] sm:$0xf]
          %v972 = vld [vmem:[#allocation8 + $0x3c] sm:$0xf]
          %v973 = vld [vmem:[%s7 + $0x5] sm:$0x1]
          %v990 = vunpack.c.l.b16 %v957
          %v991 = vunpack.c.l.b16 %v958
          %v992 = vunpack.c.l.b16 %v959
          %v993 = vunpack.c.l.b16 %v960
          %v994 = vunpack.c.l.b16 %v961
          %v995 = vunpack.c.l.b16 %v962
          %v996 = vunpack.c.l.b16 %v963
          %v997 = vunpack.c.l.b16 %v964
          %v998 = vunpack.c.l.b16 %v965
          %v999 = vunpack.c.l.b16 %v966
          %v1000 = vunpack.c.l.b16 %v967
          %v1001 = vunpack.c.l.b16 %v968
          %v1002 = vunpack.c.l.b16 %v969
          %v1003 = vunpack.c.l.b16 %v970
          %v1004 = vunpack.c.l.b16 %v971
          %v1005 = vunpack.c.l.b16 %v972
          %v1006 = vpack.c.b16 %v991, %v990
          %v1007 = vpack.c.b16 %v993, %v992
          %v1008 = vpack.c.b16 %v995, %v994
          %v1009 = vpack.c.b16 %v997, %v996
          %v1010 = vpack.c.b16 %v999, %v998
          %v1011 = vpack.c.b16 %v1001, %v1000
          %v1012 = vpack.c.b16 %v1003, %v1002
          %v1013 = vpack.c.b16 %v1005, %v1004
          %1022 = vmatprep.subr.bf16.mxu0 0
          %1023 = vmatpush1.bf16.msra.mxu0 %v1013
          %1024 = vmatprep.subr.bf16.mxu0 0
          %1025 = vmatpush1.bf16.msra.mxu0 %v1012
          %1026 = vmatprep.subr.bf16.mxu0 0
          %1027 = vmatpush1.bf16.msra.mxu0 %v1011
          %1028 = vmatprep.subr.bf16.mxu0 0
          %1029 = vmatpush1.bf16.msra.mxu0 %v1010
          %1030 = vmatprep.subr.bf16.mxu0 0
          %1031 = vmatpush1.bf16.msra.mxu0 %v1009
          %1032 = vmatprep.subr.bf16.mxu0 0
          %1033 = vmatpush1.bf16.msra.mxu0 %v1008
          %1034 = vmatprep.subr.bf16.mxu0 0
          %1035 = vmatpush1.bf16.msra.mxu0 %v1007
          %1036 = vmatprep.subr.bf16.mxu0 0
          %1037 = vmatpush1.bf16.msra.mxu0 %v1006
          %1038 = vmatprep.subr.bf16.mxu0 0
          %1039 = vmatpush2.bf16.msra.mxu0 0
          %1040 = vmatprep.subr.bf16.mxu0 0
          %1041 = vmatpush2.bf16.msra.mxu0 0
          %1042 = vmatprep.subr.bf16.mxu0 0
          %1043 = vmatpush2.bf16.msra.mxu0 0
          %1044 = vmatprep.subr.bf16.mxu0 0
          %1045 = vmatpush2.bf16.msra.mxu0 0
          %1046 = vmatprep.subr.bf16.mxu0 0
          %1047 = vmatpush2.bf16.msra.mxu0 0
          %1048 = vmatprep.subr.bf16.mxu0 0
          %1049 = vmatpush2.bf16.msra.mxu0 0
          %1050 = vmatprep.subr.bf16.mxu0 0
          %1051 = vmatpush2.bf16.msra.mxu0 0
          %1052 = vmatprep.subr.bf16.mxu0 0
          %1053 = vmatpush2.bf16.msra.mxu0 0
          %1054 = vmatprep.mubr.bf16.mxu0 0
          %1055 = vmatmul.mubr.bf16.gmra.mxu0 %v956
          %v1056 = vpop.f32.mrf.mxu0
          %v1057 = vadd.f32 %v973, %v1056
          %v1058 = vpop.f32.mrf.mxu0
          %v1059 = vpop.f32.mrf.mxu0
          %v1060 = vpop.f32.mrf.mxu0
          %1061 = vdwg.mxu0
          %1062 = vst [vmem:[%s364] sm:$0x1] %v1057
        $region72: #{encoder_forward.1} parent=51 // pred_fallthru
          _
        %s1063 = sand.u32 %s219, 1
        %s1064 = scalar_lea.sflag [#allocation5], %s1063
        %s1065 = sand.u32 %s219, 1
        %s1066 = scalar_lea.vmem [#allocation9], %s1065
        // Predicated region
        $region73: #{encoder_forward.1} parent=51 // pred_check
          %p1067 = pneg %p229
        $region74: #{encoder_forward.1} parent=51 // pred_check_branch
          %1069 = sbr.rel (%p1067) target = $region76
        $region75: #{encoder_forward.1} parent=51 // pred_region
          %s1071 = ssub.s32 16, 16
          %1072 = vsyncadd %s1064, %s1071
          %s1073 = smul.addr %s28, 16
          %s1074 = scalar_lea.hbm %s8, %s1073
          %s1076 = sshll.u32 %s1066, 4
          %s1077 = int_to_ptr.vmem [resolvable:$true] %s1076
          %1079 = dma.vmem_to_hbm [thread:$0]  %s1077, 16, %s1074, %s1064
        $region76: #{encoder_forward.1} parent=51 // pred_fallthru
          _
      $region52: #{encoder_forward.1} parent=5 // pred_fallthru
        _
      %p1080 = scmp.le.s32.totalorder 2, %s19
      // Predicated region
      $region77: #{encoder_forward.1} parent=5 // pred_check
        %p1081 = pneg %p1080
      $region78: #{encoder_forward.1} parent=5 // pred_check_branch
        %1083 = sbr.rel (%p1081) target = $region80
      $region79: #{encoder_forward.1} parent=5 // pred_region
        %s1084 = ssub.s32 %s19, 2
        // Predicated region
        $region81: #{encoder_forward.1} parent=79 // pred_check
          %p1085 = pneg %p235
        $region82: #{encoder_forward.1} parent=79 // pred_check_branch
          %1087 = sbr.rel (%p1085) target = $region84
        $region83: #{encoder_forward.1} parent=79 // pred_region
          %s1088 = sand.u32 %s220, 1
          %s1089 = scalar_lea.sflag [#allocation5], %s1088
          %s1090 = sand.u32 %s220, 1
          %s1091 = scalar_lea.vmem [#allocation9], %s1090
          %1092 = dma.done %s1089, 16
        $region84: #{encoder_forward.1} parent=79 // pred_fallthru
          _
      $region80: #{encoder_forward.1} parent=5 // pred_fallthru
        _
    $region6: #{encoder_forward.1} parent=1 // loop_footer
      %s23 = sadd.s32 1, %s19
    $region7: #{encoder_forward.1} parent=1 // loop_footer_branch
      %18 = sbr.rel target = $region3
    $region8: #{encoder_forward.1} parent=1 // loop_exit
      _
    %1093 = vsyncpa [#allocation4], 1
    %s1094 = scalar_lea.sflag [#allocation4], 1
    %1095 = vsyncpa %s1094, 1
    %1096 = vsyncpa [#allocation7], 1
    %1097 = vsyncpa [#allocation5], 1
    %s1098 = scalar_lea.sflag [#allocation5], 1
    %1099 = vsyncpa %s1098, 1

</llo_original>
